<compile_context>
chip_gen: v7x
topology: tpu7x:2x2x1
jax: 0.10.0
libtpu: 0.0.40
codegen_flags: <defaults>
</compile_context>

<pallas_src>
import functools

import jax
import jax.numpy as jnp
from jax.experimental import pallas as pl
from jax.experimental.pallas import tpu as pltpu

LANE = 128        # lane-aligned padded width for hidden and output dims
BIAS_ROWS = 8     # sublane-aligned block reserved per bias inside the slab


def _round_up(a, m):
    return (a + m - 1) // m * m


def pack_params(w1, b1, w2, b2, w3, b3):
    """Zero-pad all layer widths to LANE (and d_in to a multiple of 8) and pack
    W1,W2,W3,b1,b2,b3 into a single [d_in_pad + 2*LANE + 3*BIAS_ROWS, LANE]
    f32 slab (one DMA for all parameters)."""
    d_in = w1.shape[0]
    d_in_pad = _round_up(d_in, 8)   # keep every slab offset sublane-aligned

    def pad2(a, rows, cols):
        return jnp.pad(a, ((0, rows - a.shape[0]), (0, cols - a.shape[1])))

    w1p = pad2(w1, d_in_pad, LANE)    # [d_in_pad, 128]
    w2p = pad2(w2, LANE, LANE)        # [128, 128]
    w3p = pad2(w3, LANE, LANE)        # [128, 128]
    b1p = pad2(b1, BIAS_ROWS, LANE)   # row 0 = bias, rows 1..7 zero
    b2p = pad2(b2, BIAS_ROWS, LANE)
    b3p = pad2(b3, BIAS_ROWS, LANE)
    return jnp.concatenate([w1p, w2p, w3p, b1p, b2p, b3p], axis=0)


def _mlp_kernel(x_ref, p_ref, o_ref, *, d_in_pad):
    # Static, 8-row-aligned offsets into the packed parameter slab.
    o_w1 = 0
    o_w2 = d_in_pad
    o_w3 = d_in_pad + LANE
    o_b1 = d_in_pad + 2 * LANE
    o_b2 = o_b1 + BIAS_ROWS
    o_b3 = o_b2 + BIAS_ROWS

    x = x_ref[...]                               # [TB, d_in_pad]
    w1 = p_ref[o_w1:o_w1 + d_in_pad, :]          # [d_in_pad, 128]
    w2 = p_ref[o_w2:o_w2 + LANE, :]              # [128, 128]
    w3 = p_ref[o_w3:o_w3 + LANE, :]              # [128, 128]
    b1 = p_ref[o_b1:o_b1 + 1, :]                 # [1, 128] (broadcast over rows)
    b2 = p_ref[o_b2:o_b2 + 1, :]
    b3 = p_ref[o_b3:o_b3 + 1, :]

    h = jnp.maximum(jnp.dot(x, w1, preferred_element_type=jnp.float32) + b1, 0.0)
    h = jnp.maximum(jnp.dot(h, w2, preferred_element_type=jnp.float32) + b2, 0.0)
    h = jnp.maximum(jnp.dot(h, w3, preferred_element_type=jnp.float32) + b3, 0.0)
    o_ref[...] = h.astype(o_ref.dtype)


def net_forward(x, slab, d_in, d_out):
    """x: [B, d_in] f32; slab: packed params from pack_params(); returns [B, d_out]."""
    B = x.shape[0]
    d_in_pad = _round_up(d_in, 8)
    total_rows = d_in_pad + 2 * LANE + 3 * BIAS_ROWS
    assert slab.shape == (total_rows, LANE), slab.shape

    # Zero-pad the feature dim to match the slab's padded fan-in (exact: the
    # corresponding weight rows are zero).
    if d_in_pad != d_in:
        x = jnp.pad(x, ((0, 0), (0, d_in_pad - d_in)))

    # Batch tiling: blocks of up to 128 rows; pad B so the grid divides evenly.
    TB = min(128, _round_up(B, 8))
    B_pad = _round_up(B, TB)
    if B_pad != B:
        x = jnp.pad(x, ((0, B_pad - B), (0, 0)))

    out = pl.pallas_call(
        functools.partial(_mlp_kernel, d_in_pad=d_in_pad),
        out_shape=jax.ShapeDtypeStruct((B_pad, LANE), jnp.float32),
        grid=(B_pad // TB,),
        in_specs=[
            pl.BlockSpec((TB, d_in_pad), lambda i: (i, 0)),        # batch tile of x
            pl.BlockSpec((total_rows, LANE), lambda i: (0, 0)),    # full param slab, VMEM-resident
        ],
        out_specs=pl.BlockSpec((TB, LANE), lambda i: (i, 0)),      # lane-dense (128-wide) output
        compiler_params=pltpu.CompilerParams(
            dimension_semantics=("parallel",)),
    )(x, slab)

    return out[:B, :d_out]


def init_linear(key, fan_in, fan_out):
    """Mimics PyTorch nn.Linear init: U(-1/sqrt(fan_in), 1/sqrt(fan_in))."""
    kw, kb = jax.random.split(key)
    bound = 1.0 / jnp.sqrt(float(fan_in))
    w = jax.random.uniform(kw, (fan_in, fan_out), jnp.float32, -bound, bound)
    b = jax.random.uniform(kb, (1, fan_out), jnp.float32, -bound, bound)
    return w, b


def reference_forward(x, params):
    w1, b1, w2, b2, w3, b3 = params
    h = jnp.maximum(x @ w1 + b1, 0.0)
    h = jnp.maximum(h @ w2 + b2, 0.0)
    h = jnp.maximum(h @ w3 + b3, 0.0)   # Net applies ReLU on the output layer too
    return h


if __name__ == "__main__":
    # Module: Net(d_in=32, inner_layer_size=[50, 50], d_out=2), batch=8
    B, D_IN, H1, H2, D_OUT = 8, 32, 50, 50, 2

    key = jax.random.PRNGKey(0)
    k_x, k1, k2, k3 = jax.random.split(key, 4)

    x = jax.random.normal(k_x, (B, D_IN), jnp.float32)
    w1, b1 = init_linear(k1, D_IN, H1)
    w2, b2 = init_linear(k2, H1, H2)
    w3, b3 = init_linear(k3, H2, D_OUT)
    params = (w1, b1, w2, b2, w3, b3)

    slab = pack_params(*params)          # pack once; reusable across calls
    out = net_forward(x, slab, D_IN, D_OUT)
    out = jax.block_until_ready(out)

    ref = reference_forward(x, params)
    assert out.shape == (B, D_OUT), out.shape
    assert jnp.allclose(out, ref, atol=1e-5, rtol=1e-5), "mismatch vs reference"

    print("KERNEL_OK")
</pallas_src>

<mosaic_0001>
module attributes {stable_mosaic.version = 11 : i64} {
  func.func @_mlp_kernel(%arg0: i32, %arg1: memref<8x32xf32, #tpu.memory_space<vmem>>, %arg2: memref<312x128xf32, #tpu.memory_space<vmem>>, %arg3: memref<8x128xf32, #tpu.memory_space<vmem>>) attributes {dimension_semantics = [#tpu.dimension_semantics<parallel>], iteration_bounds = array<i64: 1>, scalar_prefetch = 0 : i64, scratch_operands = 0 : i64, tpu.core_type = #tpu.core_type<tc>, window_params = [{transform_indices = @transform_0, window_bounds = array<i64: 8, 32>}, {pipeline_mode = #tpu.pipeline_mode<synchronous>, transform_indices = @transform_1, window_bounds = array<i64: 312, 128>}, {transform_indices = @transform_2, window_bounds = array<i64: 8, 128>}]} {
    %c0 = arith.constant 0 : index
    %c0_0 = arith.constant 0 : index
    %0 = vector.load %arg1[%c0, %c0_0] : memref<8x32xf32, #tpu.memory_space<vmem>>, vector<8x32xf32>
    %c0_1 = arith.constant 0 : index
    %c0_2 = arith.constant 0 : index
    %1 = vector.load %arg2[%c0_1, %c0_2] : memref<312x128xf32, #tpu.memory_space<vmem>>, vector<32x128xf32>
    %c32 = arith.constant 32 : index
    %c0_3 = arith.constant 0 : index
    %2 = vector.load %arg2[%c32, %c0_3] : memref<312x128xf32, #tpu.memory_space<vmem>>, vector<128x128xf32>
    %c160 = arith.constant 160 : index
    %c0_4 = arith.constant 0 : index
    %3 = vector.load %arg2[%c160, %c0_4] : memref<312x128xf32, #tpu.memory_space<vmem>>, vector<128x128xf32>
    %c288 = arith.constant 288 : index
    %c0_5 = arith.constant 0 : index
    %4 = vector.load %arg2[%c288, %c0_5] : memref<312x128xf32, #tpu.memory_space<vmem>>, vector<1x128xf32>
    %c296 = arith.constant 296 : index
    %c0_6 = arith.constant 0 : index
    %5 = vector.load %arg2[%c296, %c0_6] : memref<312x128xf32, #tpu.memory_space<vmem>>, vector<1x128xf32>
    %c304 = arith.constant 304 : index
    %c0_7 = arith.constant 0 : index
    %6 = vector.load %arg2[%c304, %c0_7] : memref<312x128xf32, #tpu.memory_space<vmem>>, vector<1x128xf32>
    %cst = arith.constant dense<0.000000e+00> : vector<8x128xf32>
    %7 = tpu.matmul %0, %1, %cst {dimension_numbers = #tpu.dot_dimension_numbers<[1], [0], [0], [1], [0, 0, 1, 1], [], []>} : vector<8x32xf32>, vector<32x128xf32>, vector<8x128xf32> -> vector<8x128xf32>
    %8 = vector.broadcast %4 : vector<1x128xf32> to vector<8x128xf32>
    %9 = arith.addf %7, %8 : vector<8x128xf32>
    %cst_8 = arith.constant 0.000000e+00 : f32
    %10 = vector.broadcast %cst_8 : f32 to vector<8x128xf32>
    %11 = arith.maximumf %9, %10 : vector<8x128xf32>
    %cst_9 = arith.constant dense<0.000000e+00> : vector<8x128xf32>
    %12 = tpu.matmul %11, %2, %cst_9 {dimension_numbers = #tpu.dot_dimension_numbers<[1], [0], [0], [1], [0, 0, 1, 1], [], []>} : vector<8x128xf32>, vector<128x128xf32>, vector<8x128xf32> -> vector<8x128xf32>
    %13 = vector.broadcast %5 : vector<1x128xf32> to vector<8x128xf32>
    %14 = arith.addf %12, %13 : vector<8x128xf32>
    %cst_10 = arith.constant 0.000000e+00 : f32
    %15 = vector.broadcast %cst_10 : f32 to vector<8x128xf32>
    %16 = arith.maximumf %14, %15 : vector<8x128xf32>
    %cst_11 = arith.constant dense<0.000000e+00> : vector<8x128xf32>
    %17 = tpu.matmul %16, %3, %cst_11 {dimension_numbers = #tpu.dot_dimension_numbers<[1], [0], [0], [1], [0, 0, 1, 1], [], []>} : vector<8x128xf32>, vector<128x128xf32>, vector<8x128xf32> -> vector<8x128xf32>
    %18 = vector.broadcast %6 : vector<1x128xf32> to vector<8x128xf32>
    %19 = arith.addf %17, %18 : vector<8x128xf32>
    %cst_12 = arith.constant 0.000000e+00 : f32
    %20 = vector.broadcast %cst_12 : f32 to vector<8x128xf32>
    %21 = arith.maximumf %19, %20 : vector<8x128xf32>
    %c0_13 = arith.constant 0 : index
    %c0_14 = arith.constant 0 : index
    %22 = vector.load %arg3[%c0_13, %c0_14] : memref<8x128xf32, #tpu.memory_space<vmem>>, vector<8x128xf32>
    tpu.vector_store %arg3[%c0_13, %c0_14], %21 {strides = array<i32>} : memref<8x128xf32, #tpu.memory_space<vmem>>, vector<8x128xf32>,
    return
  }
  func.func @transform_0(%arg0: i32) -> (i32, i32) {
    %c0_i32 = arith.constant 0 : i32
    %c0_i32_0 = arith.constant 0 : i32
    return %arg0, %c0_i32 : i32, i32
  }
  func.func @transform_1(%arg0: i32) -> (i32, i32) {
    %c0_i32 = arith.constant 0 : i32
    %c0_i32_0 = arith.constant 0 : i32
    %c0_i32_1 = arith.constant 0 : i32
    return %c0_i32, %c0_i32_0 : i32, i32
  }
  func.func @transform_2(%arg0: i32) -> (i32, i32) {
    %c0_i32 = arith.constant 0 : i32
    %c0_i32_0 = arith.constant 0 : i32
    return %arg0, %c0_i32 : i32, i32
  }
}

</mosaic_0001>

<llo_original>
// kernel: tpu_custom_call.1
$region0: #{tpu_custom_call.1}
  #allocation0 [shape = 'u32[]', space=smem, size = 0x4, offset = 0x4, fixed_abs, tag = 'smem constant byte address 0x4 - core index']
  #allocation1 [shape = 'u32[144,128]{1,0:T(1,128)}', space=vmem, size = 0x12000, scoped, tag = 'internal scratch']
  %s0 = inlined_call_operand.hbm [shape: f32[8,32], index: 0, kind: input, shape index: {}]
  %s1 = inlined_call_operand.hbm [shape: f32[312,128], index: 1, kind: input, shape index: {}]
  %s2 = inlined_call_operand.hbm [shape: f32[8,128], index: 2, kind: output, shape index: {}]
  %s3 = sld [smem:[#allocation0]]
  $region26: #{tpu_custom_call.1} parent=0
    _
  %s5 = ssub.s32 1, %s3
  %s6 = scalar_select 0, %s5, %s3
  $region1: #{tpu_custom_call.1} parent=0
    #allocation2 [shape = 'u8[4096]{0}', space=vmem, size = 0x1000, scoped, tag = 'input window, operand 0, single buffered']
    #allocation3 [shape = 's32[1]{0}', space=sflag, size = 0x4, scoped, tag = 'scoped memory for tpu_custom_call.1']
    #allocation4 [shape = 's32[1]{0}', space=sflag, size = 0x4, scoped, tag = 'scoped memory for tpu_custom_call.1']
    #allocation5 [shape = 'u8[159744]{0}', space=vmem, size = 0x27000, scoped, tag = 'input window, operand 1, single buffered']
    #allocation6 [shape = 's32[1]{0}', space=sflag, size = 0x4, scoped, tag = 'scoped memory for tpu_custom_call.1']
    #allocation7 [shape = 'u8[4096]{0}', space=vmem, size = 0x1000, scoped, tag = 'output window, operand 0, single buffered']
    %7 = vsyncpa [#allocation3], 0
    %8 = vsyncpa [#allocation6], 0
    %9 = vsyncpa [#allocation4], 0
    // Predicated region
    $region2: #{tpu_custom_call.1} parent=1 // pred_check
      _
    $region3: #{tpu_custom_call.1} parent=1 // pred_check_branch
      %11 = sbr.rel (0) target = $region5
    $region4: #{tpu_custom_call.1} parent=1 // pred_region
      %s13 = ssub.s32 128, 128
      %14 = vsyncadd [#allocation3], %s13
      %s16 = sshll.u32 [#allocation2], 4
      %s17 = int_to_ptr.vmem [resolvable:$true] %s16
      %19 = dma.hbm_to_vmem [thread:$0]  %s0, 128, %s17, [#allocation3]
    $region5: #{tpu_custom_call.1} parent=1 // pred_fallthru
      _
    // Predicated region
    $region6: #{tpu_custom_call.1} parent=1 // pred_check
      _
    $region7: #{tpu_custom_call.1} parent=1 // pred_check_branch
      %21 = sbr.rel (0) target = $region9
    $region8: #{tpu_custom_call.1} parent=1 // pred_region
      %s23 = ssub.s32 4992, 4992
      %24 = vsyncadd [#allocation6], %s23
      %s25 = sshll.u32 [#allocation5], 4
      %s26 = int_to_ptr.vmem [resolvable:$true] %s25
      %31 = dma.hbm_to_vmem [thread:$0]  %s1, 4992, %s26, [#allocation6], 128, 128, 8
    $region9: #{tpu_custom_call.1} parent=1 // pred_fallthru
      _
    // Predicated region
    $region10: #{tpu_custom_call.1} parent=1 // pred_check
      _
    $region11: #{tpu_custom_call.1} parent=1 // pred_check_branch
      %33 = sbr.rel (0) target = $region13
    $region12: #{tpu_custom_call.1} parent=1 // pred_region
      %34 = dma.done [#allocation3], 128
    $region13: #{tpu_custom_call.1} parent=1 // pred_fallthru
      _
    // Predicated region
    $region14: #{tpu_custom_call.1} parent=1 // pred_check
      _
    $region15: #{tpu_custom_call.1} parent=1 // pred_check_branch
      %36 = sbr.rel (0) target = $region17
    $region16: #{tpu_custom_call.1} parent=1 // pred_region
      %37 = dma.done [#allocation6], 4992
    $region17: #{tpu_custom_call.1} parent=1 // pred_fallthru
      _
    %v38 = vld [vmem:[#allocation2] sm:$0xff]
    %v39 = vld [vmem:[#allocation5] sm:$0xff]
    %v40 = vld [vmem:[#allocation5 + $0x8] sm:$0xff]
    %v41 = vld [vmem:[#allocation5 + $0x10] sm:$0xff]
    %v42 = vld [vmem:[#allocation5 + $0x18] sm:$0xff]
    %v43 = vld [vmem:[#allocation5 + $0x20] sm:$0xff]
    %v44 = vld [vmem:[#allocation5 + $0x28] sm:$0xff]
    %v45 = vld [vmem:[#allocation5 + $0x30] sm:$0xff]
    %v46 = vld [vmem:[#allocation5 + $0x38] sm:$0xff]
    %v47 = vld [vmem:[#allocation5 + $0x40] sm:$0xff]
    %v48 = vld [vmem:[#allocation5 + $0x48] sm:$0xff]
    %v49 = vld [vmem:[#allocation5 + $0x50] sm:$0xff]
    %v50 = vld [vmem:[#allocation5 + $0x58] sm:$0xff]
    %v51 = vld [vmem:[#allocation5 + $0x60] sm:$0xff]
    %v52 = vld [vmem:[#allocation5 + $0x68] sm:$0xff]
    %v53 = vld [vmem:[#allocation5 + $0x70] sm:$0xff]
    %v54 = vld [vmem:[#allocation5 + $0x78] sm:$0xff]
    %v55 = vld [vmem:[#allocation5 + $0x80] sm:$0xff]
    %v56 = vld [vmem:[#allocation5 + $0x88] sm:$0xff]
    %v57 = vld [vmem:[#allocation5 + $0x90] sm:$0xff]
    %v58 = vld [vmem:[#allocation5 + $0x98] sm:$0xff]
    %v59 = vld [vmem:[#allocation5 + $0xa0] sm:$0xff]
    %v60 = vld [vmem:[#allocation5 + $0xa8] sm:$0xff]
    %v61 = vld [vmem:[#allocation5 + $0xb0] sm:$0xff]
    %v62 = vld [vmem:[#allocation5 + $0xb8] sm:$0xff]
    %v63 = vld [vmem:[#allocation5 + $0xc0] sm:$0xff]
    %v64 = vld [vmem:[#allocation5 + $0xc8] sm:$0xff]
    %v65 = vld [vmem:[#allocation5 + $0xd0] sm:$0xff]
    %v66 = vld [vmem:[#allocation5 + $0xd8] sm:$0xff]
    %v67 = vld [vmem:[#allocation5 + $0xe0] sm:$0xff]
    %v68 = vld [vmem:[#allocation5 + $0xe8] sm:$0xff]
    %v69 = vld [vmem:[#allocation5 + $0xf0] sm:$0xff]
    %v70 = vld [vmem:[#allocation5 + $0xf8] sm:$0xff]
    %v71 = vld [vmem:[#allocation5 + $0x100] sm:$0xff]
    %v72 = vld [vmem:[#allocation5 + $0x108] sm:$0xff]
    %v73 = vld [vmem:[#allocation5 + $0x110] sm:$0xff]
    %v74 = vld [vmem:[#allocation5 + $0x118] sm:$0xff]
    %v75 = vld [vmem:[#allocation5 + $0x120] sm:$0x1]
    %v76 = vld [vmem:[#allocation5 + $0x128] sm:$0x1]
    %v77 = vld [vmem:[#allocation5 + $0x130] sm:$0x1]
    %v78 = vlaneseq
    %v79 = vshrl.u32 %v78, 7
    %v80 = vsub.s32 0, %v79
    %v81 = vrot.slane %v75, %v80
    %vm82 = vcmask 261120
    %v84 = vsel %vm82, %v38, 0
    %86 = vmatprep.subr.mxu0 0.0
    %87 = vmatpush1.msra.mxu0 %v39
    %88 = vmatprep.subr.mxu0 0.0
    %89 = vmatpush1.msra.mxu0 %v40
    %90 = vmatprep.subr.mxu0 0.0
    %91 = vmatpush1.msra.mxu0 %v41
    %92 = vmatprep.subr.mxu0 0.0
    %93 = vmatpush1.msra.mxu0 %v42
    %94 = vmatprep.subr.mxu0 0.0
    %95 = vmatpush1.msra.mxu0 0.0
    %96 = vmatprep.subr.mxu0 0.0
    %97 = vmatpush1.msra.mxu0 0.0
    %98 = vmatprep.subr.mxu0 0.0
    %99 = vmatpush1.msra.mxu0 0.0
    %100 = vmatprep.subr.mxu0 0.0
    %101 = vmatpush1.msra.mxu0 0.0
    %102 = vmatprep.subr.mxu0 0.0
    %103 = vmatpush1.msra.mxu0 0.0
    %104 = vmatprep.subr.mxu0 0.0
    %105 = vmatpush1.msra.mxu0 0.0
    %106 = vmatprep.subr.mxu0 0.0
    %107 = vmatpush1.msra.mxu0 0.0
    %108 = vmatprep.subr.mxu0 0.0
    %109 = vmatpush1.msra.mxu0 0.0
    %110 = vmatprep.subr.mxu0 0.0
    %111 = vmatpush1.msra.mxu0 0.0
    %112 = vmatprep.subr.mxu0 0.0
    %113 = vmatpush1.msra.mxu0 0.0
    %114 = vmatprep.subr.mxu0 0.0
    %115 = vmatpush1.msra.mxu0 0.0
    %116 = vmatprep.subr.mxu0 0.0
    %117 = vmatpush1.msra.mxu0 0.0
    %118 = vmatprep.subr.mxu0 0.0
    %119 = vmatpush1.msra.mxu0 0.0
    %120 = vmatprep.subr.mxu0 0.0
    %121 = vmatpush1.msra.mxu0 0.0
    %122 = vmatprep.subr.mxu0 0.0
    %123 = vmatpush1.msra.mxu0 0.0
    %124 = vmatprep.subr.mxu0 0.0
    %125 = vmatpush1.msra.mxu0 0.0
    %126 = vmatprep.subr.mxu0 0.0
    %127 = vmatpush1.msra.mxu0 0.0
    %128 = vmatprep.subr.mxu0 0.0
    %129 = vmatpush1.msra.mxu0 0.0
    %130 = vmatprep.subr.mxu0 0.0
    %131 = vmatpush1.msra.mxu0 0.0
    %132 = vmatprep.subr.mxu0 0.0
    %133 = vmatpush1.msra.mxu0 0.0
    %134 = vmatprep.subr.mxu0 0.0
    %135 = vmatpush1.msra.mxu0 0.0
    %136 = vmatprep.subr.mxu0 0.0
    %137 = vmatpush1.msra.mxu0 0.0
    %138 = vmatprep.subr.mxu0 0.0
    %139 = vmatpush1.msra.mxu0 0.0
    %140 = vmatprep.subr.mxu0 0.0
    %141 = vmatpush1.msra.mxu0 0.0
    %142 = vmatprep.subr.mxu0 0.0
    %143 = vmatpush1.msra.mxu0 0.0
    %144 = vmatprep.subr.mxu0 0.0
    %145 = vmatpush1.msra.mxu0 0.0
    %146 = vmatprep.subr.mxu0 0.0
    %147 = vmatpush1.msra.mxu0 0.0
    %148 = vmatprep.subr.mxu0 0.0
    %149 = vmatpush1.msra.mxu0 0.0
    %150 = vmatprep.mubr.f32.mxu0 0.0
    %151 = vmatmul.mubr.f32.gmra.mrb[0].mxu0 %v84
    %v152 = vpop.f32.mrb[0].mxu0
    %v153 = vadd.f32 %v81, %v152
    %v154 = vpop.f32.mrb[0].mxu0
    %155 = vdwg.mxu0
    %v156 = vmax.f32 %v153, 0.0
    %v157 = vlaneseq
    %v158 = vshrl.u32 %v157, 7
    %v159 = vsub.s32 0, %v158
    %v160 = vrot.slane %v76, %v159
    %161 = vmatprep.subr.mxu0 0.0
    %162 = vmatpush1.msra.mxu0 %v43
    %163 = vmatprep.subr.mxu0 0.0
    %164 = vmatpush1.msra.mxu0 %v44
    %165 = vmatprep.subr.mxu0 0.0
    %166 = vmatpush1.msra.mxu0 %v45
    %167 = vmatprep.subr.mxu0 0.0
    %168 = vmatpush1.msra.mxu0 %v46
    %169 = vmatprep.subr.mxu0 0.0
    %170 = vmatpush1.msra.mxu0 %v47
    %171 = vmatprep.subr.mxu0 0.0
    %172 = vmatpush1.msra.mxu0 %v48
    %173 = vmatprep.subr.mxu0 0.0
    %174 = vmatpush1.msra.mxu0 %v49
    %175 = vmatprep.subr.mxu0 0.0
    %176 = vmatpush1.msra.mxu0 %v50
    %177 = vmatprep.subr.mxu0 0.0
    %178 = vmatpush1.msra.mxu0 %v51
    %179 = vmatprep.subr.mxu0 0.0
    %180 = vmatpush1.msra.mxu0 %v52
    %181 = vmatprep.subr.mxu0 0.0
    %182 = vmatpush1.msra.mxu0 %v53
    %183 = vmatprep.subr.mxu0 0.0
    %184 = vmatpush1.msra.mxu0 %v54
    %185 = vmatprep.subr.mxu0 0.0
    %186 = vmatpush1.msra.mxu0 %v55
    %187 = vmatprep.subr.mxu0 0.0
    %188 = vmatpush1.msra.mxu0 %v56
    %189 = vmatprep.subr.mxu0 0.0
    %190 = vmatpush1.msra.mxu0 %v57
    %191 = vmatprep.subr.mxu0 0.0
    %192 = vmatpush1.msra.mxu0 %v58
    %193 = vmatprep.subr.mxu0 0.0
    %194 = vmatpush1.msra.mxu0 0.0
    %195 = vmatprep.subr.mxu0 0.0
    %196 = vmatpush1.msra.mxu0 0.0
    %197 = vmatprep.subr.mxu0 0.0
    %198 = vmatpush1.msra.mxu0 0.0
    %199 = vmatprep.subr.mxu0 0.0
    %200 = vmatpush1.msra.mxu0 0.0
    %201 = vmatprep.subr.mxu0 0.0
    %202 = vmatpush1.msra.mxu0 0.0
    %203 = vmatprep.subr.mxu0 0.0
    %204 = vmatpush1.msra.mxu0 0.0
    %205 = vmatprep.subr.mxu0 0.0
    %206 = vmatpush1.msra.mxu0 0.0
    %207 = vmatprep.subr.mxu0 0.0
    %208 = vmatpush1.msra.mxu0 0.0
    %209 = vmatprep.subr.mxu0 0.0
    %210 = vmatpush1.msra.mxu0 0.0
    %211 = vmatprep.subr.mxu0 0.0
    %212 = vmatpush1.msra.mxu0 0.0
    %213 = vmatprep.subr.mxu0 0.0
    %214 = vmatpush1.msra.mxu0 0.0
    %215 = vmatprep.subr.mxu0 0.0
    %216 = vmatpush1.msra.mxu0 0.0
    %217 = vmatprep.subr.mxu0 0.0
    %218 = vmatpush1.msra.mxu0 0.0
    %219 = vmatprep.subr.mxu0 0.0
    %220 = vmatpush1.msra.mxu0 0.0
    %221 = vmatprep.subr.mxu0 0.0
    %222 = vmatpush1.msra.mxu0 0.0
    %223 = vmatprep.subr.mxu0 0.0
    %224 = vmatpush1.msra.mxu0 0.0
    %225 = vmatprep.mubr.f32.mxu0 0.0
    %226 = vmatmul.mubr.f32.gmra.mrb[0].mxu0 %v156
    %v227 = vpop.f32.mrb[0].mxu0
    %v228 = vadd.f32 %v160, %v227
    %v229 = vpop.f32.mrb[0].mxu0
    %230 = vdwg.mxu0
    %v231 = vmax.f32 %v228, 0.0
    %v232 = vlaneseq
    %v233 = vshrl.u32 %v232, 7
    %v234 = vsub.s32 0, %v233
    %v235 = vrot.slane %v77, %v234
    %236 = vmatprep.subr.mxu0 0.0
    %237 = vmatpush1.msra.mxu0 %v59
    %238 = vmatprep.subr.mxu0 0.0
    %239 = vmatpush1.msra.mxu0 %v60
    %240 = vmatprep.subr.mxu0 0.0
    %241 = vmatpush1.msra.mxu0 %v61
    %242 = vmatprep.subr.mxu0 0.0
    %243 = vmatpush1.msra.mxu0 %v62
    %244 = vmatprep.subr.mxu0 0.0
    %245 = vmatpush1.msra.mxu0 %v63
    %246 = vmatprep.subr.mxu0 0.0
    %247 = vmatpush1.msra.mxu0 %v64
    %248 = vmatprep.subr.mxu0 0.0
    %249 = vmatpush1.msra.mxu0 %v65
    %250 = vmatprep.subr.mxu0 0.0
    %251 = vmatpush1.msra.mxu0 %v66
    %252 = vmatprep.subr.mxu0 0.0
    %253 = vmatpush1.msra.mxu0 %v67
    %254 = vmatprep.subr.mxu0 0.0
    %255 = vmatpush1.msra.mxu0 %v68
    %256 = vmatprep.subr.mxu0 0.0
    %257 = vmatpush1.msra.mxu0 %v69
    %258 = vmatprep.subr.mxu0 0.0
    %259 = vmatpush1.msra.mxu0 %v70
    %260 = vmatprep.subr.mxu0 0.0
    %261 = vmatpush1.msra.mxu0 %v71
    %262 = vmatprep.subr.mxu0 0.0
    %263 = vmatpush1.msra.mxu0 %v72
    %264 = vmatprep.subr.mxu0 0.0
    %265 = vmatpush1.msra.mxu0 %v73
    %266 = vmatprep.subr.mxu0 0.0
    %267 = vmatpush1.msra.mxu0 %v74
    %268 = vmatprep.subr.mxu0 0.0
    %269 = vmatpush1.msra.mxu0 0.0
    %270 = vmatprep.subr.mxu0 0.0
    %271 = vmatpush1.msra.mxu0 0.0
    %272 = vmatprep.subr.mxu0 0.0
    %273 = vmatpush1.msra.mxu0 0.0
    %274 = vmatprep.subr.mxu0 0.0
    %275 = vmatpush1.msra.mxu0 0.0
    %276 = vmatprep.subr.mxu0 0.0
    %277 = vmatpush1.msra.mxu0 0.0
    %278 = vmatprep.subr.mxu0 0.0
    %279 = vmatpush1.msra.mxu0 0.0
    %280 = vmatprep.subr.mxu0 0.0
    %281 = vmatpush1.msra.mxu0 0.0
    %282 = vmatprep.subr.mxu0 0.0
    %283 = vmatpush1.msra.mxu0 0.0
    %284 = vmatprep.subr.mxu0 0.0
    %285 = vmatpush1.msra.mxu0 0.0
    %286 = vmatprep.subr.mxu0 0.0
    %287 = vmatpush1.msra.mxu0 0.0
    %288 = vmatprep.subr.mxu0 0.0
    %289 = vmatpush1.msra.mxu0 0.0
    %290 = vmatprep.subr.mxu0 0.0
    %291 = vmatpush1.msra.mxu0 0.0
    %292 = vmatprep.subr.mxu0 0.0
    %293 = vmatpush1.msra.mxu0 0.0
    %294 = vmatprep.subr.mxu0 0.0
    %295 = vmatpush1.msra.mxu0 0.0
    %296 = vmatprep.subr.mxu0 0.0
    %297 = vmatpush1.msra.mxu0 0.0
    %298 = vmatprep.subr.mxu0 0.0
    %299 = vmatpush1.msra.mxu0 0.0
    %300 = vmatprep.mubr.f32.mxu0 0.0
    %301 = vmatmul.mubr.f32.gmra.mrb[0].mxu0 %v231
    %v302 = vpop.f32.mrb[0].mxu0
    %v303 = vadd.f32 %v235, %v302
    %v304 = vpop.f32.mrb[0].mxu0
    %305 = vdwg.mxu0
    %v306 = vmax.f32 %v303, 0.0
    %307 = vst [vmem:[#allocation7] sm:$0xff] %v306
    // Predicated region
    $region18: #{tpu_custom_call.1} parent=1 // pred_check
      _
    $region19: #{tpu_custom_call.1} parent=1 // pred_check_branch
      %309 = sbr.rel (0) target = $region21
    $region20: #{tpu_custom_call.1} parent=1 // pred_region
      %s311 = ssub.s32 128, 128
      %312 = vsyncadd [#allocation4], %s311
      %s314 = sshll.u32 [#allocation7], 4
      %s315 = int_to_ptr.vmem [resolvable:$true] %s314
      %317 = dma.vmem_to_hbm [thread:$0]  %s315, 128, %s2, [#allocation4]
    $region21: #{tpu_custom_call.1} parent=1 // pred_fallthru
      _
    // Predicated region
    $region22: #{tpu_custom_call.1} parent=1 // pred_check
      _
    $region23: #{tpu_custom_call.1} parent=1 // pred_check_branch
      %319 = sbr.rel (0) target = $region25
    $region24: #{tpu_custom_call.1} parent=1 // pred_region
      %320 = dma.done [#allocation4], 128
    $region25: #{tpu_custom_call.1} parent=1 // pred_fallthru
      _
    %321 = vsyncpa [#allocation3], 1
    %322 = vsyncpa [#allocation6], 1
    %323 = vsyncpa [#allocation4], 1

</llo_original>
